<compile_context>
chip_gen: v6e
topology: v6e:2x2x1
jax: 0.10.0
libtpu: 0.0.40
codegen_flags: <defaults>
</compile_context>

<pallas_src>
import jax
import jax.numpy as jnp
from jax.experimental import pallas as pl
from jax.experimental.pallas import tpu as pltpu


def _round_up(n, m):
    return ((n + m - 1) // m) * m


# --------------------------------------------------------------------------- #
# Kernel: o = (leaky_relu(x @ W1' + b1')) @ W2 + b2   (BN already folded in W1')
# --------------------------------------------------------------------------- #
def projection_head_kernel(x_ref, w1_ref, b1_ref, w2_ref, b2_ref, o_ref):
    # Cast the activation tile to the weight dtype (bf16 fast path) in-kernel,
    # so x streams from HBM at its native width with no extra wrapper pass.
    x = x_ref[...].astype(w1_ref.dtype)
    # ---- Linear 0 with BN folded in (MXU, f32 accumulation) ----
    h = jnp.dot(x, w1_ref[...], preferred_element_type=jnp.float32) + b1_ref[...]
    # ---- LeakyReLU (negative_slope = 0.01) ----
    h = jnp.where(h >= 0, h, jnp.float32(0.01) * h)
    # ---- Dropout(p=0.1): identity in eval mode ----
    # ---- Linear 1 (MXU, f32 accumulation) ----
    h = h.astype(w2_ref.dtype)
    o = jnp.dot(h, w2_ref[...], preferred_element_type=jnp.float32) + b2_ref[...]
    o_ref[...] = o.astype(o_ref.dtype)


# --------------------------------------------------------------------------- #
# One-time parameter preparation (hoisted out of the per-call path).
# --------------------------------------------------------------------------- #
def prepare_params(params, *, compute_dtype=jnp.bfloat16, eps=1e-5):
    """Fold eval-mode BN into Linear 0, lane-pad feature dims, cast weights.

    Call once (e.g. at model load) and reuse the returned dict for every forward.
    """
    w1, b1 = params["w1"], params["b1"]          # (Fin, H1), (H1,)
    w2, b2 = params["w2"], params["b2"]          # (H1, H2), (H2,)
    gamma, beta = params["gamma"], params["beta"]
    mean, var = params["mean"], params["var"]

    Fin, H1 = w1.shape
    H2 = w2.shape[1]

    scale = gamma / jnp.sqrt(var + eps)                       # (H1,)
    w1f = w1 * scale[None, :]                                 # (Fin, H1)
    b1f = (b1 - mean) * scale + beta                          # (H1,)

    Fin_p = _round_up(Fin, 128)
    H1p = _round_up(H1, 128)
    H2p = _round_up(H2, 128)

    w1f = jnp.pad(w1f, ((0, Fin_p - Fin), (0, H1p - H1))).astype(compute_dtype)
    b1f = jnp.pad(b1f, (0, H1p - H1)).reshape(1, H1p).astype(jnp.float32)
    w2p = jnp.pad(w2, ((0, H1p - H1), (0, H2p - H2))).astype(compute_dtype)
    b2p = jnp.pad(b2, (0, H2p - H2)).reshape(1, H2p).astype(jnp.float32)

    return {
        "w1": jax.device_put(w1f), "b1": jax.device_put(b1f),
        "w2": jax.device_put(w2p), "b2": jax.device_put(b2p),
        "Fin": Fin, "Fin_p": Fin_p, "H1p": H1p, "H2": H2, "H2p": H2p,
    }


# --------------------------------------------------------------------------- #
# Forward wrapper.
# --------------------------------------------------------------------------- #
def projection_head_forward(x, prepared, *, tm=512):
    """Fused MLP forward. x: (B, Fin). Returns (B, ndim[1]) in x.dtype."""
    B, Fin = x.shape
    assert Fin == prepared["Fin"], "input feature dim mismatch with prepared params"
    Fin_p, H1p = prepared["Fin_p"], prepared["H1p"]
    H2, H2p = prepared["H2"], prepared["H2p"]
    w1, b1, w2, b2 = prepared["w1"], prepared["b1"], prepared["w2"], prepared["b2"]

    x_bytes = jnp.dtype(x.dtype).itemsize
    w_bytes = jnp.dtype(w1.dtype).itemsize
    out_dtype = x.dtype
    out_bytes = jnp.dtype(out_dtype).itemsize

    # ---- Pad batch only to the sublane quantum (8 f32 / 16 sub-32-bit) and pad K. ----
    q = 16 if x_bytes < 4 else 8
    B_pad = _round_up(B, q)
    x_in = x
    if (B_pad - B) or (Fin_p - Fin):
        x_in = jnp.pad(x_in, ((0, B_pad - B), (0, Fin_p - Fin)))

    # ---- Per-generation VMEM budget (v7x: 64 MiB/TC; v5e/v6e: 128 MiB). ----
    try:
        vmem_cap = int(getattr(pltpu.get_tpu_info(), "vmem_capacity_bytes", 64 << 20))
    except Exception:
        vmem_cap = 64 << 20
    budget = int(vmem_cap * 0.70)

    def vmem_est(tm_, wbuf):
        return (2 * tm_ * Fin_p * x_bytes            # x tile (double-buffered)
                + 2 * tm_ * H2p * out_bytes          # out tile (double-buffered)
                + wbuf * (Fin_p * H1p + H1p * H2p) * w_bytes   # resident weights
                + wbuf * 4 * (H1p + H2p)             # biases (f32)
                + tm_ * H1p * 4)                     # intermediate h (f32)

    # ---- Row-tile selection: big streaming tile, multiple of 8, within budget. ----
    tm = max(8, (int(tm) // 8) * 8)
    tm = min(tm, B_pad)
    # Keep >=2 grid steps for decent batches so megacore (v7x) can shard the grid.
    if B_pad >= 128:
        tm = min(tm, _round_up(-(-B_pad // 2), 8))
    while tm > 8 and vmem_est(tm, 1) > budget:
        tm = max(8, ((tm // 2) // 8) * 8)

    grid_n = pl.cdiv(B_pad, tm)
    vmem_limit = int(min(vmem_cap * 0.75,
                         max(vmem_est(tm, 2) * 1.25 + (2 << 20), 16 << 20)))

    flops = 2 * B_pad * (Fin_p * H1p + H1p * H2p)
    bytes_accessed = (B_pad * Fin_p * x_bytes
                      + (Fin_p * H1p + H1p * H2p) * w_bytes
                      + 4 * (H1p + H2p)
                      + B_pad * H2p * out_bytes)
    cost = pl.CostEstimate(flops=flops, transcendentals=0,
                           bytes_accessed=bytes_accessed)

    def run(single_buffer_weights):
        # Constant-index_map operands never change across grid steps ->
        # single-buffer them to halve their resident VMEM footprint.
        wkw = dict(pipeline_mode=pl.Buffered(1)) if single_buffer_weights else {}
        return pl.pallas_call(
            projection_head_kernel,
            out_shape=jax.ShapeDtypeStruct((B_pad, H2p), out_dtype),
            grid_spec=pltpu.PrefetchScalarGridSpec(
                num_scalar_prefetch=0,
                grid=(grid_n,),
                in_specs=[
                    pl.BlockSpec((tm, Fin_p), lambda i: (i, 0)),          # x row tile
                    pl.BlockSpec((Fin_p, H1p), lambda i: (0, 0), **wkw),  # W1 (BN-folded)
                    pl.BlockSpec((1, H1p),     lambda i: (0, 0), **wkw),  # b1 (BN-folded)
                    pl.BlockSpec((H1p, H2p),   lambda i: (0, 0), **wkw),  # W2
                    pl.BlockSpec((1, H2p),     lambda i: (0, 0), **wkw),  # b2
                ],
                out_specs=pl.BlockSpec((tm, H2p), lambda i: (i, 0)),
            ),
            compiler_params=pltpu.CompilerParams(
                dimension_semantics=("parallel",),
                vmem_limit_bytes=vmem_limit,
            ),
            cost_estimate=cost,
        )(x_in, w1, b1, w2, b2)

    try:
        out = run(True)
    except Exception:
        # Fallback for jax versions without BlockSpec pipeline_mode / Buffered(1).
        out = run(False)

    return out[:B, :H2]


# --------------------------------------------------------------------------- #
# Deterministic params + plain-JAX reference.
# --------------------------------------------------------------------------- #
def init_params(key, input_size, ndim):
    """Params mimicking PyTorch default init (uniform +-1/sqrt(fan_in))."""
    H1, H2 = ndim
    ks = jax.random.split(key, 8)
    lim1 = 1.0 / jnp.sqrt(jnp.float32(input_size))
    lim2 = 1.0 / jnp.sqrt(jnp.float32(H1))
    return {
        # stored as (in, out) = PyTorch weight.T
        "w1": jax.random.uniform(ks[0], (input_size, H1), jnp.float32, -lim1, lim1),
        "b1": jax.random.uniform(ks[1], (H1,), jnp.float32, -lim1, lim1),
        "w2": jax.random.uniform(ks[2], (H1, H2), jnp.float32, -lim2, lim2),
        "b2": jax.random.uniform(ks[3], (H2,), jnp.float32, -lim2, lim2),
        # BatchNorm1d parameters / running stats (eval mode).
        "gamma": 1.0 + 0.1 * jax.random.normal(ks[4], (H1,), jnp.float32),
        "beta": 0.1 * jax.random.normal(ks[5], (H1,), jnp.float32),
        "mean": 0.1 * jax.random.normal(ks[6], (H1,), jnp.float32),
        "var": jnp.abs(1.0 + 0.1 * jax.random.normal(ks[7], (H1,), jnp.float32)),
    }


def reference_forward(x, params):
    """Plain-JAX reference of the same eval-mode forward."""
    eps = 1e-5
    h = x @ params["w1"] + params["b1"]
    h = (h - params["mean"]) / jnp.sqrt(params["var"] + eps) * params["gamma"] + params["beta"]
    h = jnp.where(h >= 0, h, 0.01 * h)
    return h @ params["w2"] + params["b2"]


if __name__ == "__main__":
    # Small shapes consistent with the module: batch=16, input_size=128, ndim=[64, 32]
    B, INPUT_SIZE = 16, 128
    NDIM = [64, 32]

    key = jax.random.PRNGKey(0)
    kx, kp = jax.random.split(key)
    x = jax.random.normal(kx, (B, INPUT_SIZE), jnp.float32)
    params = init_params(kp, INPUT_SIZE, NDIM)
    ref = reference_forward(x, params)

    # One-time prep (cached across calls): bf16 default path and f32 path.
    prep_bf16 = prepare_params(params)                               # default bf16
    prep_f32 = prepare_params(params, compute_dtype=jnp.float32)

    # Default (bf16 weights, f32 accumulation) path.
    out_bf16 = jax.block_until_ready(projection_head_forward(x, prep_bf16))
    assert out_bf16.shape == (B, NDIM[1])
    assert jnp.allclose(out_bf16, ref, atol=5e-2, rtol=5e-2), "bf16 mismatch vs. reference"

    # f32 path, single-step grid.
    out_f32 = jax.block_until_ready(projection_head_forward(x, prep_f32))
    assert jnp.allclose(out_f32, ref, atol=1e-4, rtol=1e-4), "f32 mismatch vs. reference"

    # f32 path, small tile -> multi-step grid (exercises pipelining / megacore path).
    out_small = jax.block_until_ready(projection_head_forward(x, prep_f32, tm=8))
    assert jnp.allclose(out_small, ref, atol=1e-4, rtol=1e-4), "tiled mismatch vs. reference"

    # Ragged batch + partial last tile (B=13, sublane-quantum batch pad only).
    x_r = x[:13]
    ref_r = reference_forward(x_r, params)
    out_r = jax.block_until_ready(projection_head_forward(x_r, prep_bf16))
    assert out_r.shape == (13, NDIM[1])
    assert jnp.allclose(out_r, ref_r, atol=5e-2, rtol=5e-2), "ragged mismatch vs. reference"

    print("KERNEL_OK")
</pallas_src>

<mosaic_0001>
module attributes {stable_mosaic.version = 11 : i64} {
  func.func @projection_head_kernel(%arg0: i32, %arg1: memref<16x128xf32, #tpu.memory_space<vmem>>, %arg2: memref<128x128xbf16, #tpu.memory_space<vmem>>, %arg3: memref<1x128xf32, #tpu.memory_space<vmem>>, %arg4: memref<128x128xbf16, #tpu.memory_space<vmem>>, %arg5: memref<1x128xf32, #tpu.memory_space<vmem>>, %arg6: memref<16x128xf32, #tpu.memory_space<vmem>>) attributes {dimension_semantics = [#tpu.dimension_semantics<parallel>], iteration_bounds = array<i64: 1>, scalar_prefetch = 0 : i64, scratch_operands = 0 : i64, tpu.core_type = #tpu.core_type<tc>, window_params = [{transform_indices = @transform_0, window_bounds = array<i64: 16, 128>}, {pipeline_mode = #tpu.pipeline_mode<synchronous>, transform_indices = @transform_1, window_bounds = array<i64: 128, 128>}, {pipeline_mode = #tpu.pipeline_mode<synchronous>, transform_indices = @transform_2, window_bounds = array<i64: 1, 128>}, {pipeline_mode = #tpu.pipeline_mode<synchronous>, transform_indices = @transform_3, window_bounds = array<i64: 128, 128>}, {pipeline_mode = #tpu.pipeline_mode<synchronous>, transform_indices = @transform_4, window_bounds = array<i64: 1, 128>}, {transform_indices = @transform_5, window_bounds = array<i64: 16, 128>}]} {
    %c0 = arith.constant 0 : index
    %c0_0 = arith.constant 0 : index
    %0 = vector.load %arg1[%c0, %c0_0] : memref<16x128xf32, #tpu.memory_space<vmem>>, vector<16x128xf32>
    %1 = arith.truncf %0 : vector<16x128xf32> to vector<16x128xbf16>
    %c0_1 = arith.constant 0 : index
    %c0_2 = arith.constant 0 : index
    %2 = vector.load %arg2[%c0_1, %c0_2] : memref<128x128xbf16, #tpu.memory_space<vmem>>, vector<128x128xbf16>
    %cst = arith.constant dense<0.000000e+00> : vector<16x128xf32>
    %3 = tpu.matmul %1, %2, %cst {dimension_numbers = #tpu.dot_dimension_numbers<[1], [0], [0], [1], [0, 0, 1, 1], [], []>} : vector<16x128xbf16>, vector<128x128xbf16>, vector<16x128xf32> -> vector<16x128xf32>
    %c0_3 = arith.constant 0 : index
    %c0_4 = arith.constant 0 : index
    %4 = vector.load %arg3[%c0_3, %c0_4] : memref<1x128xf32, #tpu.memory_space<vmem>>, vector<1x128xf32>
    %5 = vector.broadcast %4 : vector<1x128xf32> to vector<16x128xf32>
    %6 = arith.addf %3, %5 : vector<16x128xf32>
    %cst_5 = arith.constant 0.000000e+00 : f32
    %7 = vector.broadcast %cst_5 : f32 to vector<16x128xf32>
    %8 = arith.cmpf oge, %6, %7 : vector<16x128xf32>
    %cst_6 = arith.constant 0.00999999977 : f32
    %9 = vector.broadcast %cst_6 : f32 to vector<16x128xf32>
    %10 = arith.mulf %9, %6 : vector<16x128xf32>
    %11 = arith.select %8, %6, %10 : vector<16x128xi1>, vector<16x128xf32>
    %12 = arith.truncf %11 : vector<16x128xf32> to vector<16x128xbf16>
    %c0_7 = arith.constant 0 : index
    %c0_8 = arith.constant 0 : index
    %13 = vector.load %arg4[%c0_7, %c0_8] : memref<128x128xbf16, #tpu.memory_space<vmem>>, vector<128x128xbf16>
    %cst_9 = arith.constant dense<0.000000e+00> : vector<16x128xf32>
    %14 = tpu.matmul %12, %13, %cst_9 {dimension_numbers = #tpu.dot_dimension_numbers<[1], [0], [0], [1], [0, 0, 1, 1], [], []>} : vector<16x128xbf16>, vector<128x128xbf16>, vector<16x128xf32> -> vector<16x128xf32>
    %c0_10 = arith.constant 0 : index
    %c0_11 = arith.constant 0 : index
    %15 = vector.load %arg5[%c0_10, %c0_11] : memref<1x128xf32, #tpu.memory_space<vmem>>, vector<1x128xf32>
    %16 = vector.broadcast %15 : vector<1x128xf32> to vector<16x128xf32>
    %17 = arith.addf %14, %16 : vector<16x128xf32>
    %c0_12 = arith.constant 0 : index
    %c0_13 = arith.constant 0 : index
    %18 = vector.load %arg6[%c0_12, %c0_13] : memref<16x128xf32, #tpu.memory_space<vmem>>, vector<16x128xf32>
    tpu.vector_store %arg6[%c0_12, %c0_13], %17 {strides = array<i32>} : memref<16x128xf32, #tpu.memory_space<vmem>>, vector<16x128xf32>,
    return
  }
  func.func @transform_0(%arg0: i32) -> (i32, i32) {
    %c0_i32 = arith.constant 0 : i32
    %c0_i32_0 = arith.constant 0 : i32
    return %arg0, %c0_i32 : i32, i32
  }
  func.func @transform_1(%arg0: i32) -> (i32, i32) {
    %c0_i32 = arith.constant 0 : i32
    %c0_i32_0 = arith.constant 0 : i32
    %c0_i32_1 = arith.constant 0 : i32
    return %c0_i32, %c0_i32_0 : i32, i32
  }
  func.func @transform_2(%arg0: i32) -> (i32, i32) {
    %c0_i32 = arith.constant 0 : i32
    %c0_i32_0 = arith.constant 0 : i32
    %c0_i32_1 = arith.constant 0 : i32
    return %c0_i32, %c0_i32_0 : i32, i32
  }
  func.func @transform_3(%arg0: i32) -> (i32, i32) {
    %c0_i32 = arith.constant 0 : i32
    %c0_i32_0 = arith.constant 0 : i32
    %c0_i32_1 = arith.constant 0 : i32
    return %c0_i32, %c0_i32_0 : i32, i32
  }
  func.func @transform_4(%arg0: i32) -> (i32, i32) {
    %c0_i32 = arith.constant 0 : i32
    %c0_i32_0 = arith.constant 0 : i32
    %c0_i32_1 = arith.constant 0 : i32
    return %c0_i32, %c0_i32_0 : i32, i32
  }
  func.func @transform_5(%arg0: i32) -> (i32, i32) {
    %c0_i32 = arith.constant 0 : i32
    %c0_i32_0 = arith.constant 0 : i32
    return %arg0, %c0_i32 : i32, i32
  }
}

module attributes {stable_mosaic.version = 11 : i64} {
  func.func @projection_head_kernel(%arg0: i32, %arg1: memref<16x128xf32, #tpu.memory_space<vmem>>, %arg2: memref<128x128xbf16, #tpu.memory_space<vmem>>, %arg3: memref<1x128xf32, #tpu.memory_space<vmem>>, %arg4: memref<128x128xbf16, #tpu.memory_space<vmem>>, %arg5: memref<1x128xf32, #tpu.memory_space<vmem>>, %arg6: memref<16x128xf32, #tpu.memory_space<vmem>>) attributes {dimension_semantics = [#tpu.dimension_semantics<parallel>], iteration_bounds = array<i64: 1>, scalar_prefetch = 0 : i64, scratch_operands = 0 : i64, tpu.core_type = #tpu.core_type<tc>, window_params = [{transform_indices = @transform_0, window_bounds = array<i64: 16, 128>}, {pipeline_mode = #tpu.pipeline_mode<synchronous>, transform_indices = @transform_1, window_bounds = array<i64: 128, 128>}, {pipeline_mode = #tpu.pipeline_mode<synchronous>, transform_indices = @transform_2, window_bounds = array<i64: 1, 128>}, {pipeline_mode = #tpu.pipeline_mode<synchronous>, transform_indices = @transform_3, window_bounds = array<i64: 128, 128>}, {pipeline_mode = #tpu.pipeline_mode<synchronous>, transform_indices = @transform_4, window_bounds = array<i64: 1, 128>}, {transform_indices = @transform_5, window_bounds = array<i64: 16, 128>}]} {
    %c0 = arith.constant 0 : index
    %c0_0 = arith.constant 0 : index
    %0 = vector.load %arg1[%c0, %c0_0] : memref<16x128xf32, #tpu.memory_space<vmem>>, vector<16x128xf32>
    %1 = arith.truncf %0 : vector<16x128xf32> to vector<16x128xbf16>
    %c0_1 = arith.constant 0 : index
    %c0_2 = arith.constant 0 : index
    %2 = vector.load %arg2[%c0_1, %c0_2] : memref<128x128xbf16, #tpu.memory_space<vmem>>, vector<128x128xbf16>
    %cst = arith.constant dense<0.000000e+00> : vector<16x128xf32>
    %3 = tpu.matmul %1, %2, %cst {dimension_numbers = #tpu.dot_dimension_numbers<[1], [0], [0], [1], [0, 0, 1, 1], [], []>} : vector<16x128xbf16>, vector<128x128xbf16>, vector<16x128xf32> -> vector<16x128xf32>
    %c0_3 = arith.constant 0 : index
    %c0_4 = arith.constant 0 : index
    %4 = vector.load %arg3[%c0_3, %c0_4] : memref<1x128xf32, #tpu.memory_space<vmem>>, vector<1x128xf32>
    %5 = vector.broadcast %4 : vector<1x128xf32> to vector<16x128xf32>
    %6 = arith.addf %3, %5 : vector<16x128xf32>
    %cst_5 = arith.constant 0.000000e+00 : f32
    %7 = vector.broadcast %cst_5 : f32 to vector<16x128xf32>
    %8 = arith.cmpf oge, %6, %7 : vector<16x128xf32>
    %cst_6 = arith.constant 0.00999999977 : f32
    %9 = vector.broadcast %cst_6 : f32 to vector<16x128xf32>
    %10 = arith.mulf %9, %6 : vector<16x128xf32>
    %11 = arith.select %8, %6, %10 : vector<16x128xi1>, vector<16x128xf32>
    %12 = arith.truncf %11 : vector<16x128xf32> to vector<16x128xbf16>
    %c0_7 = arith.constant 0 : index
    %c0_8 = arith.constant 0 : index
    %13 = vector.load %arg4[%c0_7, %c0_8] : memref<128x128xbf16, #tpu.memory_space<vmem>>, vector<128x128xbf16>
    %cst_9 = arith.constant dense<0.000000e+00> : vector<16x128xf32>
    %14 = tpu.matmul %12, %13, %cst_9 {dimension_numbers = #tpu.dot_dimension_numbers<[1], [0], [0], [1], [0, 0, 1, 1], [], []>} : vector<16x128xbf16>, vector<128x128xbf16>, vector<16x128xf32> -> vector<16x128xf32>
    %c0_10 = arith.constant 0 : index
    %c0_11 = arith.constant 0 : index
    %15 = vector.load %arg5[%c0_10, %c0_11] : memref<1x128xf32, #tpu.memory_space<vmem>>, vector<1x128xf32>
    %16 = vector.broadcast %15 : vector<1x128xf32> to vector<16x128xf32>
    %17 = arith.addf %14, %16 : vector<16x128xf32>
    %c0_12 = arith.constant 0 : index
    %c0_13 = arith.constant 0 : index
    %18 = vector.load %arg6[%c0_12, %c0_13] : memref<16x128xf32, #tpu.memory_space<vmem>>, vector<16x128xf32>
    tpu.vector_store %arg6[%c0_12, %c0_13], %17 {strides = array<i32>} : memref<16x128xf32, #tpu.memory_space<vmem>>, vector<16x128xf32>,
    return
  }
  func.func @transform_0(%arg0: i32) -> (i32, i32) {
    %c0_i32 = arith.constant 0 : i32
    %c0_i32_0 = arith.constant 0 : i32
    return %arg0, %c0_i32 : i32, i32
  }
  func.func @transform_1(%arg0: i32) -> (i32, i32) {
    %c0_i32 = arith.constant 0 : i32
    %c0_i32_0 = arith.constant 0 : i32
    %c0_i32_1 = arith.constant 0 : i32
    return %c0_i32, %c0_i32_0 : i32, i32
  }
  func.func @transform_2(%arg0: i32) -> (i32, i32) {
    %c0_i32 = arith.constant 0 : i32
    %c0_i32_0 = arith.constant 0 : i32
    %c0_i32_1 = arith.constant 0 : i32
    return %c0_i32, %c0_i32_0 : i32, i32
  }
  func.func @transform_3(%arg0: i32) -> (i32, i32) {
    %c0_i32 = arith.constant 0 : i32
    %c0_i32_0 = arith.constant 0 : i32
    %c0_i32_1 = arith.constant 0 : i32
    return %c0_i32, %c0_i32_0 : i32, i32
  }
  func.func @transform_4(%arg0: i32) -> (i32, i32) {
    %c0_i32 = arith.constant 0 : i32
    %c0_i32_0 = arith.constant 0 : i32
    %c0_i32_1 = arith.constant 0 : i32
    return %c0_i32, %c0_i32_0 : i32, i32
  }
  func.func @transform_5(%arg0: i32) -> (i32, i32) {
    %c0_i32 = arith.constant 0 : i32
    %c0_i32_0 = arith.constant 0 : i32
    return %arg0, %c0_i32 : i32, i32
  }
}

</mosaic_0001>

<llo_original>
// kernel: tpu_custom_call.1
$region0: #{tpu_custom_call.1}
  #allocation0 [shape = 'u32[]', space=smem, size = 0x4, offset = 0x4, fixed_abs, tag = 'smem constant byte address 0x4 - core index']
  #allocation1 [shape = 'u32[144,128]{1,0:T(1,128)}', space=vmem, size = 0x12000, scoped, tag = 'internal scratch']
  %s0 = inlined_call_operand.hbm [shape: f32[16,128], index: 0, kind: input, shape index: {}]
  %s1 = inlined_call_operand.hbm [shape: bf16[128,128], index: 1, kind: input, shape index: {}]
  %s2 = inlined_call_operand.vmem [shape: f32[1,128], index: 2, kind: input, shape index: {}]
  %s3 = inlined_call_operand.hbm [shape: bf16[128,128], index: 3, kind: input, shape index: {}]
  %s4 = inlined_call_operand.vmem [shape: f32[1,128], index: 4, kind: input, shape index: {}]
  %s5 = inlined_call_operand.hbm [shape: f32[16,128], index: 5, kind: output, shape index: {}]
  %s6 = sld [smem:[#allocation0]]
  $region42: #{tpu_custom_call.1} parent=0
    _
  %s8 = ssub.s32 1, %s6
  %s9 = scalar_select 0, %s8, %s6
  $region1: #{tpu_custom_call.1} parent=0
    #allocation2 [shape = 'u8[8192]{0}', space=vmem, size = 0x2000, scoped, tag = 'input window, operand 0, single buffered']
    #allocation3 [shape = 's32[1]{0}', space=sflag, size = 0x4, scoped, tag = 'scoped memory for tpu_custom_call.1']
    #allocation4 [shape = 's32[1]{0}', space=sflag, size = 0x4, scoped, tag = 'scoped memory for tpu_custom_call.1']
    #allocation5 [shape = 'u8[32768]{0}', space=vmem, size = 0x8000, scoped, tag = 'input window, operand 1, single buffered']
    #allocation6 [shape = 's32[1]{0}', space=sflag, size = 0x4, scoped, tag = 'scoped memory for tpu_custom_call.1']
    #allocation7 [shape = 'u8[32768]{0}', space=vmem, size = 0x8000, scoped, tag = 'input window, operand 3, single buffered']
    #allocation8 [shape = 'u8[8192]{0}', space=vmem, size = 0x2000, scoped, tag = 'output window, operand 0, single buffered']
    %10 = vsyncpa [#allocation3], 0
    %11 = vsyncpa [#allocation6], 0
    %12 = vsyncpa [#allocation4], 0
    // Predicated region
    $region2: #{tpu_custom_call.1} parent=1 // pred_check
      _
    $region3: #{tpu_custom_call.1} parent=1 // pred_check_branch
      %14 = sbr.rel (0) target = $region5
    $region4: #{tpu_custom_call.1} parent=1 // pred_region
      %s16 = ssub.s32 256, 256
      %17 = vsyncadd [#allocation3], %s16
      %s18 = sshll.u32 [#allocation2], 4
      %s19 = int_to_ptr.vmem [resolvable:$true] %s18
      %24 = dma.hbm_to_vmem [thread:$0]  %s0, 256, %s19, [#allocation3], 128, 128, 8
    $region5: #{tpu_custom_call.1} parent=1 // pred_fallthru
      _
    // Predicated region
    $region6: #{tpu_custom_call.1} parent=1 // pred_check
      _
    $region7: #{tpu_custom_call.1} parent=1 // pred_check_branch
      %26 = sbr.rel (0) target = $region9
    $region8: #{tpu_custom_call.1} parent=1 // pred_region
      %s28 = ssub.s32 1024, 1024
      %29 = vsyncadd [#allocation6], %s28
      %s30 = sshll.u32 [#allocation5], 4
      %s31 = int_to_ptr.vmem [resolvable:$true] %s30
      %36 = dma.hbm_to_vmem [thread:$0]  %s1, 1024, %s31, [#allocation6], 64, 64, 4
    $region9: #{tpu_custom_call.1} parent=1 // pred_fallthru
      _
    // Predicated region
    $region10: #{tpu_custom_call.1} parent=1 // pred_check
      _
    $region11: #{tpu_custom_call.1} parent=1 // pred_check_branch
      %38 = sbr.rel (0) target = $region13
    $region12: #{tpu_custom_call.1} parent=1 // pred_region
      _
    $region13: #{tpu_custom_call.1} parent=1 // pred_fallthru
      _
    // Predicated region
    $region14: #{tpu_custom_call.1} parent=1 // pred_check
      _
    $region15: #{tpu_custom_call.1} parent=1 // pred_check_branch
      %40 = sbr.rel (0) target = $region17
    $region16: #{tpu_custom_call.1} parent=1 // pred_region
      %s42 = ssub.s32 1024, 1024
      %43 = vsyncadd [#allocation6], %s42
      %s44 = sshll.u32 [#allocation7], 4
      %s45 = int_to_ptr.vmem [resolvable:$true] %s44
      %50 = dma.hbm_to_vmem [thread:$0]  %s3, 1024, %s45, [#allocation6], 64, 64, 4
    $region17: #{tpu_custom_call.1} parent=1 // pred_fallthru
      _
    // Predicated region
    $region18: #{tpu_custom_call.1} parent=1 // pred_check
      _
    $region19: #{tpu_custom_call.1} parent=1 // pred_check_branch
      %52 = sbr.rel (0) target = $region21
    $region20: #{tpu_custom_call.1} parent=1 // pred_region
      _
    $region21: #{tpu_custom_call.1} parent=1 // pred_fallthru
      _
    // Predicated region
    $region22: #{tpu_custom_call.1} parent=1 // pred_check
      _
    $region23: #{tpu_custom_call.1} parent=1 // pred_check_branch
      %54 = sbr.rel (0) target = $region25
    $region24: #{tpu_custom_call.1} parent=1 // pred_region
      %55 = dma.done [#allocation3], 256
    $region25: #{tpu_custom_call.1} parent=1 // pred_fallthru
      _
    // Predicated region
    $region26: #{tpu_custom_call.1} parent=1 // pred_check
      _
    $region27: #{tpu_custom_call.1} parent=1 // pred_check_branch
      %57 = sbr.rel (0) target = $region29
    $region28: #{tpu_custom_call.1} parent=1 // pred_region
      %58 = dma.done [#allocation6], 1024
    $region29: #{tpu_custom_call.1} parent=1 // pred_fallthru
      _
    // Predicated region
    $region30: #{tpu_custom_call.1} parent=1 // pred_check
      _
    $region31: #{tpu_custom_call.1} parent=1 // pred_check_branch
      %60 = sbr.rel (0) target = $region33
    $region32: #{tpu_custom_call.1} parent=1 // pred_region
      %61 = dma.done [#allocation6], 1024
    $region33: #{tpu_custom_call.1} parent=1 // pred_fallthru
      _
    %v63 = vld [vmem:[#allocation2] sm:$0xff]
    %v64 = vld [vmem:[#allocation2 + $0x8] sm:$0xff]
    %v65 = vpack.c.bf16 %v64, %v63
    %v66 = vld [vmem:[#allocation5] sm:$0xf]
    %v67 = vld [vmem:[#allocation5 + $0x4] sm:$0xf]
    %v68 = vld [vmem:[#allocation5 + $0x8] sm:$0xf]
    %v69 = vld [vmem:[#allocation5 + $0xc] sm:$0xf]
    %v70 = vld [vmem:[#allocation5 + $0x10] sm:$0xf]
    %v71 = vld [vmem:[#allocation5 + $0x14] sm:$0xf]
    %v72 = vld [vmem:[#allocation5 + $0x18] sm:$0xf]
    %v73 = vld [vmem:[#allocation5 + $0x1c] sm:$0xf]
    %v74 = vld [vmem:[#allocation5 + $0x20] sm:$0xf]
    %v75 = vld [vmem:[#allocation5 + $0x24] sm:$0xf]
    %v76 = vld [vmem:[#allocation5 + $0x28] sm:$0xf]
    %v77 = vld [vmem:[#allocation5 + $0x2c] sm:$0xf]
    %v78 = vld [vmem:[#allocation5 + $0x30] sm:$0xf]
    %v79 = vld [vmem:[#allocation5 + $0x34] sm:$0xf]
    %v80 = vld [vmem:[#allocation5 + $0x38] sm:$0xf]
    %v81 = vld [vmem:[#allocation5 + $0x3c] sm:$0xf]
    %v82 = vld [vmem:[%s2] sm:$0x1]
    %v84 = vlaneseq
    %v85 = vshrl.u32 %v84, 7
    %v86 = vsub.s32 0, %v85
    %v87 = vrot.slane %v82, %v86
    %v105 = vunpack.c.l.b16 %v66
    %v106 = vunpack.c.l.b16 %v67
    %v107 = vunpack.c.l.b16 %v68
    %v108 = vunpack.c.l.b16 %v69
    %v109 = vunpack.c.l.b16 %v70
    %v110 = vunpack.c.l.b16 %v71
    %v111 = vunpack.c.l.b16 %v72
    %v112 = vunpack.c.l.b16 %v73
    %v113 = vunpack.c.l.b16 %v74
    %v114 = vunpack.c.l.b16 %v75
    %v115 = vunpack.c.l.b16 %v76
    %v116 = vunpack.c.l.b16 %v77
    %v117 = vunpack.c.l.b16 %v78
    %v118 = vunpack.c.l.b16 %v79
    %v119 = vunpack.c.l.b16 %v80
    %v120 = vunpack.c.l.b16 %v81
    %v121 = vpack.c.b16 %v106, %v105
    %v122 = vpack.c.b16 %v108, %v107
    %v123 = vpack.c.b16 %v110, %v109
    %v124 = vpack.c.b16 %v112, %v111
    %v125 = vpack.c.b16 %v114, %v113
    %v126 = vpack.c.b16 %v116, %v115
    %v127 = vpack.c.b16 %v118, %v117
    %v128 = vpack.c.b16 %v120, %v119
    %137 = vmatprep.subr.bf16.mxu0 0
    %138 = vmatpush1.bf16.msra.mxu0 %v128
    %139 = vmatprep.subr.bf16.mxu0 0
    %140 = vmatpush1.bf16.msra.mxu0 %v127
    %141 = vmatprep.subr.bf16.mxu0 0
    %142 = vmatpush1.bf16.msra.mxu0 %v126
    %143 = vmatprep.subr.bf16.mxu0 0
    %144 = vmatpush1.bf16.msra.mxu0 %v125
    %145 = vmatprep.subr.bf16.mxu0 0
    %146 = vmatpush1.bf16.msra.mxu0 %v124
    %147 = vmatprep.subr.bf16.mxu0 0
    %148 = vmatpush1.bf16.msra.mxu0 %v123
    %149 = vmatprep.subr.bf16.mxu0 0
    %150 = vmatpush1.bf16.msra.mxu0 %v122
    %151 = vmatprep.subr.bf16.mxu0 0
    %152 = vmatpush1.bf16.msra.mxu0 %v121
    %153 = vmatprep.subr.bf16.mxu0 0
    %154 = vmatpush2.bf16.msra.mxu0 0
    %155 = vmatprep.subr.bf16.mxu0 0
    %156 = vmatpush2.bf16.msra.mxu0 0
    %157 = vmatprep.subr.bf16.mxu0 0
    %158 = vmatpush2.bf16.msra.mxu0 0
    %159 = vmatprep.subr.bf16.mxu0 0
    %160 = vmatpush2.bf16.msra.mxu0 0
    %161 = vmatprep.subr.bf16.mxu0 0
    %162 = vmatpush2.bf16.msra.mxu0 0
    %163 = vmatprep.subr.bf16.mxu0 0
    %164 = vmatpush2.bf16.msra.mxu0 0
    %165 = vmatprep.subr.bf16.mxu0 0
    %166 = vmatpush2.bf16.msra.mxu0 0
    %167 = vmatprep.subr.bf16.mxu0 0
    %168 = vmatpush2.bf16.msra.mxu0 0
    %169 = vmatprep.mubr.bf16.mxu0 0
    %170 = vmatmul.mubr.bf16.gmra.mxu0 %v65
    %v171 = vpop.f32.mrf.mxu0
    %v172 = vadd.f32 %v87, %v171
    %v173 = vpop.f32.mrf.mxu0
    %v174 = vpop.f32.mrf.mxu0
    %v175 = vadd.f32 %v87, %v174
    %v176 = vpop.f32.mrf.mxu0
    %177 = vdwg.mxu0
    %vm178 = vcmp.ge.f32.partialorder %v172, 0.0
    %vm179 = vcmp.ge.f32.partialorder %v175, 0.0
    %v180 = vmul.f32 %v172, 0.01
    %v181 = vmul.f32 %v175, 0.01
    %v182 = vsel %vm178, %v172, %v180
    %v183 = vsel %vm179, %v175, %v181
    %v184 = vpack.c.bf16 %v183, %v182
    %v185 = vld [vmem:[#allocation7] sm:$0xf]
    %v186 = vld [vmem:[#allocation7 + $0x4] sm:$0xf]
    %v187 = vld [vmem:[#allocation7 + $0x8] sm:$0xf]
    %v188 = vld [vmem:[#allocation7 + $0xc] sm:$0xf]
    %v189 = vld [vmem:[#allocation7 + $0x10] sm:$0xf]
    %v190 = vld [vmem:[#allocation7 + $0x14] sm:$0xf]
    %v191 = vld [vmem:[#allocation7 + $0x18] sm:$0xf]
    %v192 = vld [vmem:[#allocation7 + $0x1c] sm:$0xf]
    %v193 = vld [vmem:[#allocation7 + $0x20] sm:$0xf]
    %v194 = vld [vmem:[#allocation7 + $0x24] sm:$0xf]
    %v195 = vld [vmem:[#allocation7 + $0x28] sm:$0xf]
    %v196 = vld [vmem:[#allocation7 + $0x2c] sm:$0xf]
    %v197 = vld [vmem:[#allocation7 + $0x30] sm:$0xf]
    %v198 = vld [vmem:[#allocation7 + $0x34] sm:$0xf]
    %v199 = vld [vmem:[#allocation7 + $0x38] sm:$0xf]
    %v200 = vld [vmem:[#allocation7 + $0x3c] sm:$0xf]
    %v201 = vld [vmem:[%s4] sm:$0x1]
    %v203 = vlaneseq
    %v204 = vshrl.u32 %v203, 7
    %v205 = vsub.s32 0, %v204
    %v206 = vrot.slane %v201, %v205
    %v224 = vunpack.c.l.b16 %v185
    %v225 = vunpack.c.l.b16 %v186
    %v226 = vunpack.c.l.b16 %v187
    %v227 = vunpack.c.l.b16 %v188
    %v228 = vunpack.c.l.b16 %v189
    %v229 = vunpack.c.l.b16 %v190
    %v230 = vunpack.c.l.b16 %v191
    %v231 = vunpack.c.l.b16 %v192
    %v232 = vunpack.c.l.b16 %v193
    %v233 = vunpack.c.l.b16 %v194
    %v234 = vunpack.c.l.b16 %v195
    %v235 = vunpack.c.l.b16 %v196
    %v236 = vunpack.c.l.b16 %v197
    %v237 = vunpack.c.l.b16 %v198
    %v238 = vunpack.c.l.b16 %v199
    %v239 = vunpack.c.l.b16 %v200
    %v240 = vpack.c.b16 %v225, %v224
    %v241 = vpack.c.b16 %v227, %v226
    %v242 = vpack.c.b16 %v229, %v228
    %v243 = vpack.c.b16 %v231, %v230
    %v244 = vpack.c.b16 %v233, %v232
    %v245 = vpack.c.b16 %v235, %v234
    %v246 = vpack.c.b16 %v237, %v236
    %v247 = vpack.c.b16 %v239, %v238
    %256 = vmatprep.subr.bf16.mxu0 0
    %257 = vmatpush1.bf16.msra.mxu0 %v247
    %258 = vmatprep.subr.bf16.mxu0 0
    %259 = vmatpush1.bf16.msra.mxu0 %v246
    %260 = vmatprep.subr.bf16.mxu0 0
    %261 = vmatpush1.bf16.msra.mxu0 %v245
    %262 = vmatprep.subr.bf16.mxu0 0
    %263 = vmatpush1.bf16.msra.mxu0 %v244
    %264 = vmatprep.subr.bf16.mxu0 0
    %265 = vmatpush1.bf16.msra.mxu0 %v243
    %266 = vmatprep.subr.bf16.mxu0 0
    %267 = vmatpush1.bf16.msra.mxu0 %v242
    %268 = vmatprep.subr.bf16.mxu0 0
    %269 = vmatpush1.bf16.msra.mxu0 %v241
    %270 = vmatprep.subr.bf16.mxu0 0
    %271 = vmatpush1.bf16.msra.mxu0 %v240
    %272 = vmatprep.subr.bf16.mxu0 0
    %273 = vmatpush2.bf16.msra.mxu0 0
    %274 = vmatprep.subr.bf16.mxu0 0
    %275 = vmatpush2.bf16.msra.mxu0 0
    %276 = vmatprep.subr.bf16.mxu0 0
    %277 = vmatpush2.bf16.msra.mxu0 0
    %278 = vmatprep.subr.bf16.mxu0 0
    %279 = vmatpush2.bf16.msra.mxu0 0
    %280 = vmatprep.subr.bf16.mxu0 0
    %281 = vmatpush2.bf16.msra.mxu0 0
    %282 = vmatprep.subr.bf16.mxu0 0
    %283 = vmatpush2.bf16.msra.mxu0 0
    %284 = vmatprep.subr.bf16.mxu0 0
    %285 = vmatpush2.bf16.msra.mxu0 0
    %286 = vmatprep.subr.bf16.mxu0 0
    %287 = vmatpush2.bf16.msra.mxu0 0
    %288 = vmatprep.mubr.bf16.mxu0 0
    %289 = vmatmul.mubr.bf16.gmra.mxu0 %v184
    %v290 = vpop.f32.mrf.mxu0
    %v291 = vadd.f32 %v206, %v290
    %v292 = vpop.f32.mrf.mxu0
    %v293 = vpop.f32.mrf.mxu0
    %v294 = vadd.f32 %v206, %v293
    %v295 = vpop.f32.mrf.mxu0
    %296 = vdwg.mxu0
    %297 = vst [vmem:[#allocation8] sm:$0xff] %v291
    %298 = vst [vmem:[#allocation8 + $0x8] sm:$0xff] %v294
    // Predicated region
    $region34: #{tpu_custom_call.1} parent=1 // pred_check
      _
    $region35: #{tpu_custom_call.1} parent=1 // pred_check_branch
      %300 = sbr.rel (0) target = $region37
    $region36: #{tpu_custom_call.1} parent=1 // pred_region
      %s302 = ssub.s32 256, 256
      %303 = vsyncadd [#allocation4], %s302
      %s304 = sshll.u32 [#allocation8], 4
      %s305 = int_to_ptr.vmem [resolvable:$true] %s304
      %310 = dma.vmem_to_hbm [thread:$0]  %s305, 256, %s5, [#allocation4], 128, 128, 8
    $region37: #{tpu_custom_call.1} parent=1 // pred_fallthru
      _
    // Predicated region
    $region38: #{tpu_custom_call.1} parent=1 // pred_check
      _
    $region39: #{tpu_custom_call.1} parent=1 // pred_check_branch
      %312 = sbr.rel (0) target = $region41
    $region40: #{tpu_custom_call.1} parent=1 // pred_region
      %313 = dma.done [#allocation4], 256
    $region41: #{tpu_custom_call.1} parent=1 // pred_fallthru
      _
    %314 = vsyncpa [#allocation3], 1
    %315 = vsyncpa [#allocation6], 1
    %316 = vsyncpa [#allocation4], 1

// kernel: tpu_custom_call.1
$region0: #{tpu_custom_call.1}
  #allocation0 [shape = 'u32[]', space=smem, size = 0x4, offset = 0x4, fixed_abs, tag = 'smem constant byte address 0x4 - core index']
  #allocation1 [shape = 'u32[144,128]{1,0:T(1,128)}', space=vmem, size = 0x12000, scoped, tag = 'internal scratch']
  %s0 = inlined_call_operand.hbm [shape: f32[16,128], index: 0, kind: input, shape index: {}]
  %s1 = inlined_call_operand.hbm [shape: bf16[128,128], index: 1, kind: input, shape index: {}]
  %s2 = inlined_call_operand.vmem [shape: f32[1,128], index: 2, kind: input, shape index: {}]
  %s3 = inlined_call_operand.hbm [shape: bf16[128,128], index: 3, kind: input, shape index: {}]
  %s4 = inlined_call_operand.vmem [shape: f32[1,128], index: 4, kind: input, shape index: {}]
  %s5 = inlined_call_operand.hbm [shape: f32[16,128], index: 5, kind: output, shape index: {}]
  %s6 = sld [smem:[#allocation0]]
  $region42: #{tpu_custom_call.1} parent=0
    _
  %s8 = ssub.s32 1, %s6
  %s9 = scalar_select 0, %s8, %s6
  $region1: #{tpu_custom_call.1} parent=0
    #allocation2 [shape = 'u8[8192]{0}', space=vmem, size = 0x2000, scoped, tag = 'input window, operand 0, single buffered']
    #allocation3 [shape = 's32[1]{0}', space=sflag, size = 0x4, scoped, tag = 'scoped memory for tpu_custom_call.1']
    #allocation4 [shape = 's32[1]{0}', space=sflag, size = 0x4, scoped, tag = 'scoped memory for tpu_custom_call.1']
    #allocation5 [shape = 'u8[32768]{0}', space=vmem, size = 0x8000, scoped, tag = 'input window, operand 1, single buffered']
    #allocation6 [shape = 's32[1]{0}', space=sflag, size = 0x4, scoped, tag = 'scoped memory for tpu_custom_call.1']
    #allocation7 [shape = 'u8[32768]{0}', space=vmem, size = 0x8000, scoped, tag = 'input window, operand 3, single buffered']
    #allocation8 [shape = 'u8[8192]{0}', space=vmem, size = 0x2000, scoped, tag = 'output window, operand 0, single buffered']
    %10 = vsyncpa [#allocation3], 0
    %11 = vsyncpa [#allocation6], 0
    %12 = vsyncpa [#allocation4], 0
    // Predicated region
    $region2: #{tpu_custom_call.1} parent=1 // pred_check
      _
    $region3: #{tpu_custom_call.1} parent=1 // pred_check_branch
      %14 = sbr.rel (0) target = $region5
    $region4: #{tpu_custom_call.1} parent=1 // pred_region
      %s16 = ssub.s32 256, 256
      %17 = vsyncadd [#allocation3], %s16
      %s18 = sshll.u32 [#allocation2], 4
      %s19 = int_to_ptr.vmem [resolvable:$true] %s18
      %24 = dma.hbm_to_vmem [thread:$0]  %s0, 256, %s19, [#allocation3], 128, 128, 8
    $region5: #{tpu_custom_call.1} parent=1 // pred_fallthru
      _
    // Predicated region
    $region6: #{tpu_custom_call.1} parent=1 // pred_check
      _
    $region7: #{tpu_custom_call.1} parent=1 // pred_check_branch
      %26 = sbr.rel (0) target = $region9
    $region8: #{tpu_custom_call.1} parent=1 // pred_region
      %s28 = ssub.s32 1024, 1024
      %29 = vsyncadd [#allocation6], %s28
      %s30 = sshll.u32 [#allocation5], 4
      %s31 = int_to_ptr.vmem [resolvable:$true] %s30
      %36 = dma.hbm_to_vmem [thread:$0]  %s1, 1024, %s31, [#allocation6], 64, 64, 4
    $region9: #{tpu_custom_call.1} parent=1 // pred_fallthru
      _
    // Predicated region
    $region10: #{tpu_custom_call.1} parent=1 // pred_check
      _
    $region11: #{tpu_custom_call.1} parent=1 // pred_check_branch
      %38 = sbr.rel (0) target = $region13
    $region12: #{tpu_custom_call.1} parent=1 // pred_region
      _
    $region13: #{tpu_custom_call.1} parent=1 // pred_fallthru
      _
    // Predicated region
    $region14: #{tpu_custom_call.1} parent=1 // pred_check
      _
    $region15: #{tpu_custom_call.1} parent=1 // pred_check_branch
      %40 = sbr.rel (0) target = $region17
    $region16: #{tpu_custom_call.1} parent=1 // pred_region
      %s42 = ssub.s32 1024, 1024
      %43 = vsyncadd [#allocation6], %s42
      %s44 = sshll.u32 [#allocation7], 4
      %s45 = int_to_ptr.vmem [resolvable:$true] %s44
      %50 = dma.hbm_to_vmem [thread:$0]  %s3, 1024, %s45, [#allocation6], 64, 64, 4
    $region17: #{tpu_custom_call.1} parent=1 // pred_fallthru
      _
    // Predicated region
    $region18: #{tpu_custom_call.1} parent=1 // pred_check
      _
    $region19: #{tpu_custom_call.1} parent=1 // pred_check_branch
      %52 = sbr.rel (0) target = $region21
    $region20: #{tpu_custom_call.1} parent=1 // pred_region
      _
    $region21: #{tpu_custom_call.1} parent=1 // pred_fallthru
      _
    // Predicated region
    $region22: #{tpu_custom_call.1} parent=1 // pred_check
      _
    $region23: #{tpu_custom_call.1} parent=1 // pred_check_branch
      %54 = sbr.rel (0) target = $region25
    $region24: #{tpu_custom_call.1} parent=1 // pred_region
      %55 = dma.done [#allocation3], 256
    $region25: #{tpu_custom_call.1} parent=1 // pred_fallthru
      _
    // Predicated region
    $region26: #{tpu_custom_call.1} parent=1 // pred_check
      _
    $region27: #{tpu_custom_call.1} parent=1 // pred_check_branch
      %57 = sbr.rel (0) target = $region29
    $region28: #{tpu_custom_call.1} parent=1 // pred_region
      %58 = dma.done [#allocation6], 1024
    $region29: #{tpu_custom_call.1} parent=1 // pred_fallthru
      _
    // Predicated region
    $region30: #{tpu_custom_call.1} parent=1 // pred_check
      _
    $region31: #{tpu_custom_call.1} parent=1 // pred_check_branch
      %60 = sbr.rel (0) target = $region33
    $region32: #{tpu_custom_call.1} parent=1 // pred_region
      %61 = dma.done [#allocation6], 1024
    $region33: #{tpu_custom_call.1} parent=1 // pred_fallthru
      _
    %v63 = vld [vmem:[#allocation2] sm:$0xff]
    %v64 = vld [vmem:[#allocation2 + $0x8] sm:$0xff]
    %v65 = vpack.c.bf16 %v64, %v63
    %v66 = vld [vmem:[#allocation5] sm:$0xf]
    %v67 = vld [vmem:[#allocation5 + $0x4] sm:$0xf]
    %v68 = vld [vmem:[#allocation5 + $0x8] sm:$0xf]
    %v69 = vld [vmem:[#allocation5 + $0xc] sm:$0xf]
    %v70 = vld [vmem:[#allocation5 + $0x10] sm:$0xf]
    %v71 = vld [vmem:[#allocation5 + $0x14] sm:$0xf]
    %v72 = vld [vmem:[#allocation5 + $0x18] sm:$0xf]
    %v73 = vld [vmem:[#allocation5 + $0x1c] sm:$0xf]
    %v74 = vld [vmem:[#allocation5 + $0x20] sm:$0xf]
    %v75 = vld [vmem:[#allocation5 + $0x24] sm:$0xf]
    %v76 = vld [vmem:[#allocation5 + $0x28] sm:$0xf]
    %v77 = vld [vmem:[#allocation5 + $0x2c] sm:$0xf]
    %v78 = vld [vmem:[#allocation5 + $0x30] sm:$0xf]
    %v79 = vld [vmem:[#allocation5 + $0x34] sm:$0xf]
    %v80 = vld [vmem:[#allocation5 + $0x38] sm:$0xf]
    %v81 = vld [vmem:[#allocation5 + $0x3c] sm:$0xf]
    %v82 = vld [vmem:[%s2] sm:$0x1]
    %v84 = vlaneseq
    %v85 = vshrl.u32 %v84, 7
    %v86 = vsub.s32 0, %v85
    %v87 = vrot.slane %v82, %v86
    %v105 = vunpack.c.l.b16 %v66
    %v106 = vunpack.c.l.b16 %v67
    %v107 = vunpack.c.l.b16 %v68
    %v108 = vunpack.c.l.b16 %v69
    %v109 = vunpack.c.l.b16 %v70
    %v110 = vunpack.c.l.b16 %v71
    %v111 = vunpack.c.l.b16 %v72
    %v112 = vunpack.c.l.b16 %v73
    %v113 = vunpack.c.l.b16 %v74
    %v114 = vunpack.c.l.b16 %v75
    %v115 = vunpack.c.l.b16 %v76
    %v116 = vunpack.c.l.b16 %v77
    %v117 = vunpack.c.l.b16 %v78
    %v118 = vunpack.c.l.b16 %v79
    %v119 = vunpack.c.l.b16 %v80
    %v120 = vunpack.c.l.b16 %v81
    %v121 = vpack.c.b16 %v106, %v105
    %v122 = vpack.c.b16 %v108, %v107
    %v123 = vpack.c.b16 %v110, %v109
    %v124 = vpack.c.b16 %v112, %v111
    %v125 = vpack.c.b16 %v114, %v113
    %v126 = vpack.c.b16 %v116, %v115
    %v127 = vpack.c.b16 %v118, %v117
    %v128 = vpack.c.b16 %v120, %v119
    %137 = vmatprep.subr.bf16.mxu0 0
    %138 = vmatpush1.bf16.msra.mxu0 %v128
    %139 = vmatprep.subr.bf16.mxu0 0
    %140 = vmatpush1.bf16.msra.mxu0 %v127
    %141 = vmatprep.subr.bf16.mxu0 0
    %142 = vmatpush1.bf16.msra.mxu0 %v126
    %143 = vmatprep.subr.bf16.mxu0 0
    %144 = vmatpush1.bf16.msra.mxu0 %v125
    %145 = vmatprep.subr.bf16.mxu0 0
    %146 = vmatpush1.bf16.msra.mxu0 %v124
    %147 = vmatprep.subr.bf16.mxu0 0
    %148 = vmatpush1.bf16.msra.mxu0 %v123
    %149 = vmatprep.subr.bf16.mxu0 0
    %150 = vmatpush1.bf16.msra.mxu0 %v122
    %151 = vmatprep.subr.bf16.mxu0 0
    %152 = vmatpush1.bf16.msra.mxu0 %v121
    %153 = vmatprep.subr.bf16.mxu0 0
    %154 = vmatpush2.bf16.msra.mxu0 0
    %155 = vmatprep.subr.bf16.mxu0 0
    %156 = vmatpush2.bf16.msra.mxu0 0
    %157 = vmatprep.subr.bf16.mxu0 0
    %158 = vmatpush2.bf16.msra.mxu0 0
    %159 = vmatprep.subr.bf16.mxu0 0
    %160 = vmatpush2.bf16.msra.mxu0 0
    %161 = vmatprep.subr.bf16.mxu0 0
    %162 = vmatpush2.bf16.msra.mxu0 0
    %163 = vmatprep.subr.bf16.mxu0 0
    %164 = vmatpush2.bf16.msra.mxu0 0
    %165 = vmatprep.subr.bf16.mxu0 0
    %166 = vmatpush2.bf16.msra.mxu0 0
    %167 = vmatprep.subr.bf16.mxu0 0
    %168 = vmatpush2.bf16.msra.mxu0 0
    %169 = vmatprep.mubr.bf16.mxu0 0
    %170 = vmatmul.mubr.bf16.gmra.mxu0 %v65
    %v171 = vpop.f32.mrf.mxu0
    %v172 = vadd.f32 %v87, %v171
    %v173 = vpop.f32.mrf.mxu0
    %v174 = vpop.f32.mrf.mxu0
    %v175 = vadd.f32 %v87, %v174
    %v176 = vpop.f32.mrf.mxu0
    %177 = vdwg.mxu0
    %vm178 = vcmp.ge.f32.partialorder %v172, 0.0
    %vm179 = vcmp.ge.f32.partialorder %v175, 0.0
    %v180 = vmul.f32 %v172, 0.01
    %v181 = vmul.f32 %v175, 0.01
    %v182 = vsel %vm178, %v172, %v180
    %v183 = vsel %vm179, %v175, %v181
    %v184 = vpack.c.bf16 %v183, %v182
    %v185 = vld [vmem:[#allocation7] sm:$0xf]
    %v186 = vld [vmem:[#allocation7 + $0x4] sm:$0xf]
    %v187 = vld [vmem:[#allocation7 + $0x8] sm:$0xf]
    %v188 = vld [vmem:[#allocation7 + $0xc] sm:$0xf]
    %v189 = vld [vmem:[#allocation7 + $0x10] sm:$0xf]
    %v190 = vld [vmem:[#allocation7 + $0x14] sm:$0xf]
    %v191 = vld [vmem:[#allocation7 + $0x18] sm:$0xf]
    %v192 = vld [vmem:[#allocation7 + $0x1c] sm:$0xf]
    %v193 = vld [vmem:[#allocation7 + $0x20] sm:$0xf]
    %v194 = vld [vmem:[#allocation7 + $0x24] sm:$0xf]
    %v195 = vld [vmem:[#allocation7 + $0x28] sm:$0xf]
    %v196 = vld [vmem:[#allocation7 + $0x2c] sm:$0xf]
    %v197 = vld [vmem:[#allocation7 + $0x30] sm:$0xf]
    %v198 = vld [vmem:[#allocation7 + $0x34] sm:$0xf]
    %v199 = vld [vmem:[#allocation7 + $0x38] sm:$0xf]
    %v200 = vld [vmem:[#allocation7 + $0x3c] sm:$0xf]
    %v201 = vld [vmem:[%s4] sm:$0x1]
    %v203 = vlaneseq
    %v204 = vshrl.u32 %v203, 7
    %v205 = vsub.s32 0, %v204
    %v206 = vrot.slane %v201, %v205
    %v224 = vunpack.c.l.b16 %v185
    %v225 = vunpack.c.l.b16 %v186
    %v226 = vunpack.c.l.b16 %v187
    %v227 = vunpack.c.l.b16 %v188
    %v228 = vunpack.c.l.b16 %v189
    %v229 = vunpack.c.l.b16 %v190
    %v230 = vunpack.c.l.b16 %v191
    %v231 = vunpack.c.l.b16 %v192
    %v232 = vunpack.c.l.b16 %v193
    %v233 = vunpack.c.l.b16 %v194
    %v234 = vunpack.c.l.b16 %v195
    %v235 = vunpack.c.l.b16 %v196
    %v236 = vunpack.c.l.b16 %v197
    %v237 = vunpack.c.l.b16 %v198
    %v238 = vunpack.c.l.b16 %v199
    %v239 = vunpack.c.l.b16 %v200
    %v240 = vpack.c.b16 %v225, %v224
    %v241 = vpack.c.b16 %v227, %v226
    %v242 = vpack.c.b16 %v229, %v228
    %v243 = vpack.c.b16 %v231, %v230
    %v244 = vpack.c.b16 %v233, %v232
    %v245 = vpack.c.b16 %v235, %v234
    %v246 = vpack.c.b16 %v237, %v236
    %v247 = vpack.c.b16 %v239, %v238
    %256 = vmatprep.subr.bf16.mxu0 0
    %257 = vmatpush1.bf16.msra.mxu0 %v247
    %258 = vmatprep.subr.bf16.mxu0 0
    %259 = vmatpush1.bf16.msra.mxu0 %v246
    %260 = vmatprep.subr.bf16.mxu0 0
    %261 = vmatpush1.bf16.msra.mxu0 %v245
    %262 = vmatprep.subr.bf16.mxu0 0
    %263 = vmatpush1.bf16.msra.mxu0 %v244
    %264 = vmatprep.subr.bf16.mxu0 0
    %265 = vmatpush1.bf16.msra.mxu0 %v243
    %266 = vmatprep.subr.bf16.mxu0 0
    %267 = vmatpush1.bf16.msra.mxu0 %v242
    %268 = vmatprep.subr.bf16.mxu0 0
    %269 = vmatpush1.bf16.msra.mxu0 %v241
    %270 = vmatprep.subr.bf16.mxu0 0
    %271 = vmatpush1.bf16.msra.mxu0 %v240
    %272 = vmatprep.subr.bf16.mxu0 0
    %273 = vmatpush2.bf16.msra.mxu0 0
    %274 = vmatprep.subr.bf16.mxu0 0
    %275 = vmatpush2.bf16.msra.mxu0 0
    %276 = vmatprep.subr.bf16.mxu0 0
    %277 = vmatpush2.bf16.msra.mxu0 0
    %278 = vmatprep.subr.bf16.mxu0 0
    %279 = vmatpush2.bf16.msra.mxu0 0
    %280 = vmatprep.subr.bf16.mxu0 0
    %281 = vmatpush2.bf16.msra.mxu0 0
    %282 = vmatprep.subr.bf16.mxu0 0
    %283 = vmatpush2.bf16.msra.mxu0 0
    %284 = vmatprep.subr.bf16.mxu0 0
    %285 = vmatpush2.bf16.msra.mxu0 0
    %286 = vmatprep.subr.bf16.mxu0 0
    %287 = vmatpush2.bf16.msra.mxu0 0
    %288 = vmatprep.mubr.bf16.mxu0 0
    %289 = vmatmul.mubr.bf16.gmra.mxu0 %v184
    %v290 = vpop.f32.mrf.mxu0
    %v291 = vadd.f32 %v206, %v290
    %v292 = vpop.f32.mrf.mxu0
    %v293 = vpop.f32.mrf.mxu0
    %v294 = vadd.f32 %v206, %v293
    %v295 = vpop.f32.mrf.mxu0
    %296 = vdwg.mxu0
    %297 = vst [vmem:[#allocation8] sm:$0xff] %v291
    %298 = vst [vmem:[#allocation8 + $0x8] sm:$0xff] %v294
    // Predicated region
    $region34: #{tpu_custom_call.1} parent=1 // pred_check
      _
    $region35: #{tpu_custom_call.1} parent=1 // pred_check_branch
      %300 = sbr.rel (0) target = $region37
    $region36: #{tpu_custom_call.1} parent=1 // pred_region
      %s302 = ssub.s32 256, 256
      %303 = vsyncadd [#allocation4], %s302
      %s304 = sshll.u32 [#allocation8], 4
      %s305 = int_to_ptr.vmem [resolvable:$true] %s304
      %310 = dma.vmem_to_hbm [thread:$0]  %s305, 256, %s5, [#allocation4], 128, 128, 8
    $region37: #{tpu_custom_call.1} parent=1 // pred_fallthru
      _
    // Predicated region
    $region38: #{tpu_custom_call.1} parent=1 // pred_check
      _
    $region39: #{tpu_custom_call.1} parent=1 // pred_check_branch
      %312 = sbr.rel (0) target = $region41
    $region40: #{tpu_custom_call.1} parent=1 // pred_region
      %313 = dma.done [#allocation4], 256
    $region41: #{tpu_custom_call.1} parent=1 // pred_fallthru
      _
    %314 = vsyncpa [#allocation3], 1
    %315 = vsyncpa [#allocation6], 1
    %316 = vsyncpa [#allocation4], 1

</llo_original>
